<compile_context>
chip_gen: v6e
topology: v6e:2x2x1
jax: 0.10.0
libtpu: 0.0.40
codegen_flags: <defaults>
</compile_context>

<pallas_src>
import functools

import jax
import jax.numpy as jnp
from jax.experimental import pallas as pl
from jax.experimental.pallas import tpu as pltpu


# VMEM budget for the double-buffered working set; kept well under v7x's
# 64 MiB/TC so the same tiling is safe on v5e / v6e / v7x.
_VMEM_BUDGET_BYTES = 24 << 20
_VMEM_LIMIT_BYTES = 32 << 20
_MAX_TILE_ROWS = 2048


def _round_up(a: int, b: int) -> int:
    return (a + b - 1) // b * b


def _min_sublane(dtype) -> int:
    # dtype-aware sublane granule: f32 -> 8 rows, bf16 -> 16, int8/fp8 -> 32.
    return {4: 8, 2: 16, 1: 32}.get(jnp.dtype(dtype).itemsize, 8)


def _choose_tile_rows(n_rows: int, bytes_per_row: int, min_rows: int) -> int:
    """Largest row-tile (multiple of `min_rows`) whose double-buffered footprint
    fits the VMEM budget.  Both kernels are memory-bound, so the biggest tile
    that fits amortizes the ~0.35us/grid-step overhead and lengthens DMAs."""
    tile = _MAX_TILE_ROWS
    while tile > min_rows and 2 * tile * bytes_per_row > _VMEM_BUDGET_BYTES:
        tile //= 2
    tile = max(tile, min_rows)
    return min(tile, _round_up(max(n_rows, 1), min_rows))


# ----------------------------- LayerNormalization -----------------------------
def _layernorm_kernel(x_ref, alpha_ref, bias_ref, o_ref, *, eps):
    x = x_ref[...].astype(jnp.float32)
    f = x.shape[-1]
    mean = jnp.mean(x, axis=-1, keepdims=True)
    xc = x - mean
    # torch.Tensor.std is UNBIASED (divide by N-1); eps is added to std, not var.
    var = jnp.sum(xc * xc, axis=-1, keepdims=True) * (1.0 / max(f - 1, 1))
    inv = 1.0 / (jnp.sqrt(var) + eps)   # per-row column divide; avoids a full-tile divide
    y = (xc * inv) * alpha_ref[...].astype(jnp.float32) + bias_ref[...].astype(jnp.float32)
    o_ref[...] = y.astype(o_ref.dtype)


def layer_norm(x2d, alpha, bias, *, eps=1e-6):
    n, f = x2d.shape
    itemsize = jnp.dtype(x2d.dtype).itemsize
    # x block + out block dominate the working set (alpha/bias blocks are tiny).
    tile = _choose_tile_rows(n, bytes_per_row=2 * f * itemsize,
                             min_rows=_min_sublane(x2d.dtype))
    n_pad = _round_up(n, tile)
    xp = jnp.pad(x2d, ((0, n_pad - n), (0, 0))) if n_pad != n else x2d

    out = pl.pallas_call(
        functools.partial(_layernorm_kernel, eps=eps),
        out_shape=jax.ShapeDtypeStruct((n_pad, f), x2d.dtype),
        grid=(n_pad // tile,),
        in_specs=[
            pl.BlockSpec((tile, f), lambda i: (i, 0)),
            pl.BlockSpec((1, f), lambda i: (0, 0)),
            pl.BlockSpec((1, f), lambda i: (0, 0)),
        ],
        out_specs=pl.BlockSpec((tile, f), lambda i: (i, 0)),
        compiler_params=pltpu.CompilerParams(
            dimension_semantics=("parallel",),
            vmem_limit_bytes=_VMEM_LIMIT_BYTES,
        ),
    )(xp, alpha.reshape(1, f), bias.reshape(1, f))
    return out[:n] if n_pad != n else out


# --------------------------- dropout + residual add ---------------------------
def _residual_dropout_kernel(x_ref, y_ref, u_ref, o_ref, *, p):
    y = y_ref[...]
    keep = u_ref[...] >= jnp.float32(p)                       # P(keep) = 1 - p
    scale = jnp.asarray(1.0 / (1.0 - p), dtype=y.dtype)
    o_ref[...] = x_ref[...] + jnp.where(keep, y * scale, jnp.zeros_like(y))


def _residual_add_kernel(x_ref, y_ref, o_ref):
    o_ref[...] = x_ref[...] + y_ref[...]


def _choose_lane_width(total: int) -> int:
    for w in (2048, 1024, 512, 256, 128):
        if total % w == 0:
            return w
    return 128


def _lane_dense(a, rows, width):
    flat = a.reshape(-1)
    pad = rows * width - flat.shape[0]
    if pad:
        flat = jnp.pad(flat, (0, pad))
    return flat.reshape(rows, width)


def residual_add_dropout(x, y, key, *, p, training):
    """out = x + dropout_p(y); elementwise, so it runs on a lane-dense slab."""
    assert x.shape == y.shape and x.dtype == y.dtype
    orig_shape, total = x.shape, x.size
    use_dropout = bool(training) and 0.0 < p < 1.0
    if bool(training) and p >= 1.0:            # torch drops everything at p == 1
        y = jnp.zeros_like(y)

    width = _choose_lane_width(total)
    rows = -(-total // width)
    itemsize = jnp.dtype(x.dtype).itemsize
    bytes_per_row = 3 * width * itemsize + (width * 4 if use_dropout else 0)
    tile = _choose_tile_rows(rows, bytes_per_row=bytes_per_row,
                             min_rows=_min_sublane(x.dtype))
    rows_pad = _round_up(rows, tile)

    xd = _lane_dense(x, rows_pad, width)
    yd = _lane_dense(y, rows_pad, width)

    spec = pl.BlockSpec((tile, width), lambda i: (i, 0))
    cp = pltpu.CompilerParams(
        dimension_semantics=("parallel",),      # independent tiles; shards across v7x's 2 TCs
        vmem_limit_bytes=_VMEM_LIMIT_BYTES,
    )

    if use_dropout:
        # TODO(synk): dropout mask is drawn host-side with jax.random and streamed into
        # the kernel; the in-kernel pltpu.prng_* path is TPU-only (no interpret/CPU
        # lowering).  Same Bernoulli(1-p) + 1/(1-p) scaling semantics as torch.nn.Dropout,
        # but a different random stream than torch.
        u = jax.random.uniform(key, (rows_pad, width), dtype=jnp.float32)
        out = pl.pallas_call(
            functools.partial(_residual_dropout_kernel, p=float(p)),
            out_shape=jax.ShapeDtypeStruct((rows_pad, width), x.dtype),
            grid=(rows_pad // tile,),
            in_specs=[spec, spec, spec],
            out_specs=spec,
            input_output_aliases={1: 0},        # reuse y's buffer for the output
            compiler_params=cp,
        )(xd, yd, u)
    else:
        out = pl.pallas_call(
            _residual_add_kernel,
            out_shape=jax.ShapeDtypeStruct((rows_pad, width), x.dtype),
            grid=(rows_pad // tile,),
            in_specs=[spec, spec],
            out_specs=spec,
            input_output_aliases={1: 0},
            compiler_params=cp,
        )(xd, yd)

    return out.reshape(-1)[:total].reshape(orig_shape)


# ------------------------------ ResidualConnection -----------------------------
class ResidualConnection:
    """x + dropout(sublayer(LayerNorm(x))); LayerNorm and dropout+add run in Pallas."""

    def __init__(self, features: int, dropout: float, eps: float = 1e-6):
        self.features = features
        self.p = float(dropout)
        self.eps = eps
        # Deterministic parameter init (matches nn.Parameter(ones/zeros)).
        self.alpha = jnp.ones((features,), jnp.float32)
        self.bias = jnp.zeros((features,), jnp.float32)

    def __call__(self, x, sublayer, *, training=True, rng_key=None):
        b, s, f = x.shape
        assert f == self.features
        x2d = x.reshape(b * s, f)
        normed = layer_norm(x2d, self.alpha, self.bias, eps=self.eps).reshape(b, s, f)
        # TODO(synk): `sublayer` is an arbitrary user JAX callable, so LayerNorm and
        # dropout+residual cannot be fused into it generically; when the sublayer is a
        # known matmul, fold LN into its LHS load and dropout+add into its epilogue to
        # save ~2 full activation passes over HBM.
        y = sublayer(normed)
        if rng_key is None:
            rng_key = jax.random.PRNGKey(0)
        return residual_add_dropout(x, y, rng_key, p=self.p, training=training)


# ------------------------------------ main -------------------------------------
if __name__ == "__main__":
    batch, seq, features = 2, 8, 32
    dropout_p = 0.1

    key = jax.random.PRNGKey(0)
    kx, kw, kb, kd = jax.random.split(key, 4)
    x = jax.random.normal(kx, (batch, seq, features), dtype=jnp.float32)

    # Representative sublayer: a deterministic linear layer (plain-JAX glue;
    # any JAX callable — including another Pallas kernel — works here).
    w = jax.random.normal(kw, (features, features), dtype=jnp.float32) * 0.02
    bvec = jax.random.normal(kb, (features,), dtype=jnp.float32) * 0.02
    sublayer = lambda h: jnp.einsum("bsf,fg->bsg", h, w) + bvec

    block = ResidualConnection(features, dropout_p)
    out = block(x, sublayer, training=True, rng_key=kd)
    out = jax.block_until_ready(out)
    assert out.shape == (batch, seq, features) and out.dtype == jnp.float32
    assert bool(jnp.all(jnp.isfinite(out)))
    print("KERNEL_OK")
</pallas_src>

<mosaic_0001>
module attributes {stable_mosaic.version = 11 : i64} {
  func.func @_layernorm_kernel(%arg0: i32, %arg1: memref<16x32xf32, #tpu.memory_space<vmem>>, %arg2: memref<1x32xf32, #tpu.memory_space<vmem>>, %arg3: memref<1x32xf32, #tpu.memory_space<vmem>>, %arg4: memref<16x32xf32, #tpu.memory_space<vmem>>) attributes {dimension_semantics = [#tpu.dimension_semantics<parallel>], iteration_bounds = array<i64: 1>, scalar_prefetch = 0 : i64, scratch_operands = 0 : i64, tpu.core_type = #tpu.core_type<tc>, window_params = [{transform_indices = @transform_0, window_bounds = array<i64: 16, 32>}, {pipeline_mode = #tpu.pipeline_mode<synchronous>, transform_indices = @transform_1, window_bounds = array<i64: 1, 32>}, {pipeline_mode = #tpu.pipeline_mode<synchronous>, transform_indices = @transform_2, window_bounds = array<i64: 1, 32>}, {transform_indices = @transform_3, window_bounds = array<i64: 16, 32>}]} {
    %c0 = arith.constant 0 : index
    %c0_0 = arith.constant 0 : index
    %0 = vector.load %arg1[%c0, %c0_0] : memref<16x32xf32, #tpu.memory_space<vmem>>, vector<16x32xf32>
    %cst = arith.constant dense<0.000000e+00> : vector<16xf32>
    %1 = vector.multi_reduction <add>, %0, %cst [1] : vector<16x32xf32> to vector<16xf32>
    %2 = vector.shape_cast %1 : vector<16xf32> to vector<16x1xf32>
    %cst_1 = arith.constant 3.200000e+01 : f32
    %3 = vector.broadcast %cst_1 : f32 to vector<16x1xf32>
    %4 = arith.divf %2, %3 : vector<16x1xf32>
    %5 = vector.broadcast %4 : vector<16x1xf32> to vector<16x32xf32>
    %6 = arith.subf %0, %5 : vector<16x32xf32>
    %7 = arith.mulf %6, %6 : vector<16x32xf32>
    %cst_2 = arith.constant dense<0.000000e+00> : vector<16xf32>
    %8 = vector.multi_reduction <add>, %7, %cst_2 [1] : vector<16x32xf32> to vector<16xf32>
    %9 = vector.shape_cast %8 : vector<16xf32> to vector<16x1xf32>
    %cst_3 = arith.constant 0.0322580636 : f32
    %10 = vector.broadcast %cst_3 : f32 to vector<16x1xf32>
    %11 = arith.mulf %9, %10 : vector<16x1xf32>
    %12 = math.sqrt %11 : vector<16x1xf32>
    %cst_4 = arith.constant 9.99999997E-7 : f32
    %13 = vector.broadcast %cst_4 : f32 to vector<16x1xf32>
    %14 = arith.addf %12, %13 : vector<16x1xf32>
    %cst_5 = arith.constant 1.000000e+00 : f32
    %15 = vector.broadcast %cst_5 : f32 to vector<16x1xf32>
    %16 = arith.divf %15, %14 : vector<16x1xf32>
    %17 = vector.broadcast %16 : vector<16x1xf32> to vector<16x32xf32>
    %18 = arith.mulf %6, %17 : vector<16x32xf32>
    %c0_6 = arith.constant 0 : index
    %c0_7 = arith.constant 0 : index
    %19 = vector.load %arg2[%c0_6, %c0_7] : memref<1x32xf32, #tpu.memory_space<vmem>>, vector<1x32xf32>
    %20 = vector.broadcast %19 : vector<1x32xf32> to vector<16x32xf32>
    %21 = arith.mulf %18, %20 : vector<16x32xf32>
    %c0_8 = arith.constant 0 : index
    %c0_9 = arith.constant 0 : index
    %22 = vector.load %arg3[%c0_8, %c0_9] : memref<1x32xf32, #tpu.memory_space<vmem>>, vector<1x32xf32>
    %23 = vector.broadcast %22 : vector<1x32xf32> to vector<16x32xf32>
    %24 = arith.addf %21, %23 : vector<16x32xf32>
    %c0_10 = arith.constant 0 : index
    %c0_11 = arith.constant 0 : index
    %25 = vector.load %arg4[%c0_10, %c0_11] : memref<16x32xf32, #tpu.memory_space<vmem>>, vector<16x32xf32>
    tpu.vector_store %arg4[%c0_10, %c0_11], %24 {strides = array<i32>} : memref<16x32xf32, #tpu.memory_space<vmem>>, vector<16x32xf32>,
    return
  }
  func.func @transform_0(%arg0: i32) -> (i32, i32) {
    %c0_i32 = arith.constant 0 : i32
    %c0_i32_0 = arith.constant 0 : i32
    return %arg0, %c0_i32 : i32, i32
  }
  func.func @transform_1(%arg0: i32) -> (i32, i32) {
    %c0_i32 = arith.constant 0 : i32
    %c0_i32_0 = arith.constant 0 : i32
    %c0_i32_1 = arith.constant 0 : i32
    return %c0_i32, %c0_i32_0 : i32, i32
  }
  func.func @transform_2(%arg0: i32) -> (i32, i32) {
    %c0_i32 = arith.constant 0 : i32
    %c0_i32_0 = arith.constant 0 : i32
    %c0_i32_1 = arith.constant 0 : i32
    return %c0_i32, %c0_i32_0 : i32, i32
  }
  func.func @transform_3(%arg0: i32) -> (i32, i32) {
    %c0_i32 = arith.constant 0 : i32
    %c0_i32_0 = arith.constant 0 : i32
    return %arg0, %c0_i32 : i32, i32
  }
}

</mosaic_0001>

<llo_original>
// kernel: tpu_custom_call.1
$region0: #{tpu_custom_call.1}
  #allocation0 [shape = 'u32[]', space=smem, size = 0x4, offset = 0x4, fixed_abs, tag = 'smem constant byte address 0x4 - core index']
  #allocation1 [shape = 'u32[144,128]{1,0:T(1,128)}', space=vmem, size = 0x12000, scoped, tag = 'internal scratch']
  %s0 = inlined_call_operand.hbm [shape: f32[16,32], index: 0, kind: input, shape index: {}]
  %s1 = inlined_call_operand.vmem [shape: f32[1,32], index: 1, kind: input, shape index: {}]
  %s2 = inlined_call_operand.vmem [shape: f32[1,32], index: 2, kind: input, shape index: {}]
  %s3 = inlined_call_operand.hbm [shape: f32[16,32], index: 3, kind: output, shape index: {}]
  %s4 = sld [smem:[#allocation0]]
  $region26: #{tpu_custom_call.1} parent=0
    _
  %s6 = ssub.s32 1, %s4
  %s7 = scalar_select 0, %s6, %s4
  $region1: #{tpu_custom_call.1} parent=0
    #allocation2 [shape = 'u8[8192]{0}', space=vmem, size = 0x2000, scoped, tag = 'input window, operand 0, single buffered']
    #allocation3 [shape = 's32[1]{0}', space=sflag, size = 0x4, scoped, tag = 'scoped memory for tpu_custom_call.1']
    #allocation4 [shape = 's32[1]{0}', space=sflag, size = 0x4, scoped, tag = 'scoped memory for tpu_custom_call.1']
    #allocation5 [shape = 'u8[8192]{0}', space=vmem, size = 0x2000, scoped, tag = 'output window, operand 0, single buffered']
    %8 = vsyncpa [#allocation3], 0
    %9 = vsyncpa [#allocation4], 0
    // Predicated region
    $region2: #{tpu_custom_call.1} parent=1 // pred_check
      _
    $region3: #{tpu_custom_call.1} parent=1 // pred_check_branch
      %11 = sbr.rel (0) target = $region5
    $region4: #{tpu_custom_call.1} parent=1 // pred_region
      %s13 = ssub.s32 256, 256
      %14 = vsyncadd [#allocation3], %s13
      %s15 = sshll.u32 [#allocation2], 4
      %s16 = int_to_ptr.vmem [resolvable:$true] %s15
      %21 = dma.hbm_to_vmem [thread:$0]  %s0, 256, %s16, [#allocation3], 128, 128, 8
    $region5: #{tpu_custom_call.1} parent=1 // pred_fallthru
      _
    // Predicated region
    $region6: #{tpu_custom_call.1} parent=1 // pred_check
      _
    $region7: #{tpu_custom_call.1} parent=1 // pred_check_branch
      %23 = sbr.rel (0) target = $region9
    $region8: #{tpu_custom_call.1} parent=1 // pred_region
      _
    $region9: #{tpu_custom_call.1} parent=1 // pred_fallthru
      _
    // Predicated region
    $region10: #{tpu_custom_call.1} parent=1 // pred_check
      _
    $region11: #{tpu_custom_call.1} parent=1 // pred_check_branch
      %25 = sbr.rel (0) target = $region13
    $region12: #{tpu_custom_call.1} parent=1 // pred_region
      _
    $region13: #{tpu_custom_call.1} parent=1 // pred_fallthru
      _
    // Predicated region
    $region14: #{tpu_custom_call.1} parent=1 // pred_check
      _
    $region15: #{tpu_custom_call.1} parent=1 // pred_check_branch
      %27 = sbr.rel (0) target = $region17
    $region16: #{tpu_custom_call.1} parent=1 // pred_region
      %28 = dma.done [#allocation3], 256
    $region17: #{tpu_custom_call.1} parent=1 // pred_fallthru
      _
    %v29 = vld [vmem:[#allocation2] sm:$0xff]
    %v30 = vld [vmem:[#allocation2 + $0x8] sm:$0xff]
    %vm31 = vcmask 261120
    %v32 = vsel %vm31, %v29, 0.0
    %33 = vadd.xlane.f32.xlu0 %v32
    %v34 = vpop.xlane.xlu0 %33
    %v35 = vsel %vm31, %v30, 0.0
    %36 = vadd.xlane.f32.xlu0 %v35
    %v37 = vpop.xlane.xlu0 %36
    %v38 = vrcp.pop 32.0
    %v39 = vmul.f32 %v34, %v38
    %v40 = vmul.f32 %v37, %v38
    %v41 = vsub.f32 %v29, %v39
    %v42 = vsub.f32 %v30, %v40
    %v43 = vmul.f32 %v41, %v41
    %v44 = vmul.f32 %v42, %v42
    %v45 = vsel %vm31, %v43, 0.0
    %46 = vadd.xlane.f32.xlu0 %v45
    %v47 = vpop.xlane.xlu0 %46
    %v48 = vsel %vm31, %v44, 0.0
    %49 = vadd.xlane.f32.xlu0 %v48
    %v50 = vpop.xlane.xlu0 %49
    %v51 = vmul.f32 %v47, 0.032258064
    %v52 = vmul.f32 %v50, 0.032258064
    %v53 = vrsqrt.pop %v51
    %v54 = vmul.f32 %v51, %v53
    %vm55 = vcmp.eq.f32.partialorder %v51, inf
    %v56 = vsel %vm55, %v51, %v54
    %vm57 = vcmp.eq.f32.partialorder %v51, 0.0
    %v58 = vand.u32 %v51, 2147483648
    %v59 = vsel %vm57, %v58, %v56
    %v60 = vrsqrt.pop %v52
    %v61 = vmul.f32 %v52, %v60
    %vm62 = vcmp.eq.f32.partialorder %v52, inf
    %v63 = vsel %vm62, %v52, %v61
    %vm64 = vcmp.eq.f32.partialorder %v52, 0.0
    %v65 = vand.u32 %v52, 2147483648
    %v66 = vsel %vm64, %v65, %v63
    %v67 = vadd.f32 %v59, 1e-06
    %v68 = vadd.f32 %v66, 1e-06
    %v69 = vrcp.pop %v67
    %v70 = vmul.f32 1.0, %v69
    %v71 = vrcp.pop %v68
    %v72 = vmul.f32 1.0, %v71
    %v73 = vmul.f32 %v41, %v70
    %v74 = vmul.f32 %v42, %v72
    %v75 = vld [vmem:[%s1] sm:$0x1]
    %v77 = vlaneseq
    %v78 = vshrl.u32 %v77, 7
    %v79 = vsub.s32 0, %v78
    %v80 = vrot.slane %v75, %v79
    %v82 = vmul.f32 %v73, %v80
    %v83 = vmul.f32 %v74, %v80
    %v84 = vld [vmem:[%s2] sm:$0x1]
    %v86 = vlaneseq
    %v87 = vshrl.u32 %v86, 7
    %v88 = vsub.s32 0, %v87
    %v89 = vrot.slane %v84, %v88
    %v91 = vadd.f32 %v82, %v89
    %v92 = vadd.f32 %v83, %v89
    %93 = vst.msk [vmem:[#allocation5] sm:$0xff] %vm31, %v91
    %94 = vst.msk [vmem:[#allocation5 + $0x8] sm:$0xff] %vm31, %v92
    // Predicated region
    $region18: #{tpu_custom_call.1} parent=1 // pred_check
      _
    $region19: #{tpu_custom_call.1} parent=1 // pred_check_branch
      %96 = sbr.rel (0) target = $region21
    $region20: #{tpu_custom_call.1} parent=1 // pred_region
      %s98 = ssub.s32 256, 256
      %99 = vsyncadd [#allocation4], %s98
      %s100 = sshll.u32 [#allocation5], 4
      %s101 = int_to_ptr.vmem [resolvable:$true] %s100
      %106 = dma.vmem_to_hbm [thread:$0]  %s101, 256, %s3, [#allocation4], 128, 128, 8
    $region21: #{tpu_custom_call.1} parent=1 // pred_fallthru
      _
    // Predicated region
    $region22: #{tpu_custom_call.1} parent=1 // pred_check
      _
    $region23: #{tpu_custom_call.1} parent=1 // pred_check_branch
      %108 = sbr.rel (0) target = $region25
    $region24: #{tpu_custom_call.1} parent=1 // pred_region
      %109 = dma.done [#allocation4], 256
    $region25: #{tpu_custom_call.1} parent=1 // pred_fallthru
      _
    %110 = vsyncpa [#allocation3], 1
    %111 = vsyncpa [#allocation4], 1

</llo_original>
